<compile_context>
chip_gen: v6e
topology: v6e:2x2x1
jax: 0.10.0
libtpu: 0.0.40
codegen_flags: <defaults>
</compile_context>

<pallas_src>
import jax
import jax.numpy as jnp
from jax.experimental import pallas as pl
from jax.experimental.pallas import tpu as pltpu


OUT_PAD = 128  # last-layer output padded from 4 -> 128 lanes


# ----------------------------- Pallas kernel -------------------------------

def deepnn_kernel(x_ref,
                  w1_ref, b1_ref,
                  w2_ref, b2_ref,
                  w3_ref, b3_ref,
                  w4_ref, b4_ref,
                  w5_ref, b5_ref,
                  o_ref):
    x = x_ref[...]                                                  # (tb, 3) f32

    # Layer 1 (K=3): three broadcast FMAs on the VPU (f32), skip the MXU.
    h = (x[:, 0:1] * w1_ref[0:1, :]
         + x[:, 1:2] * w1_ref[1:2, :]
         + x[:, 2:3] * w1_ref[2:3, :]
         + b1_ref[...])
    h = jnp.maximum(h, 0.0)                                         # (tb, 64) f32

    # Layers 2-4: bf16 operands on the MXU, f32 accumulation, f32 bias+ReLU.
    h = jnp.maximum(
        jnp.dot(h.astype(w2_ref.dtype), w2_ref[...],
                preferred_element_type=jnp.float32) + b2_ref[...], 0.0)
    h = jnp.maximum(
        jnp.dot(h.astype(w3_ref.dtype), w3_ref[...],
                preferred_element_type=jnp.float32) + b3_ref[...], 0.0)
    h = jnp.maximum(
        jnp.dot(h.astype(w4_ref.dtype), w4_ref[...],
                preferred_element_type=jnp.float32) + b4_ref[...], 0.0)

    # Layer 5: weights zero-padded 4 -> 128 out-columns => lane-dense store.
    o_ref[...] = (
        jnp.dot(h.astype(w5_ref.dtype), w5_ref[...],
                preferred_element_type=jnp.float32) + b5_ref[...]
    ).astype(o_ref.dtype)


# ------------------------------ host wrapper --------------------------------

def _round_up(n, m):
    return ((n + m - 1) // m) * m


def deepnn_forward(x, params, *, tile_b=512, use_bf16=True):
    """x: (B, 3) float32.  params: list of (W, b) with W stored as (in, out)."""
    B, in_dim = x.shape
    assert in_dim == 3
    out_dim = params[-1][0].shape[1]                                # 4

    # Cap the tile at the (sublane-aligned) batch so tiny batches don't over-pad,
    # then pad the batch to a tile multiple (ragged batches supported).
    tile_b = max(8, min(tile_b, _round_up(B, 8)))
    tile_b = _round_up(tile_b, 8)
    B_pad = _round_up(B, tile_b)
    if B_pad != B:
        x = jnp.pad(x, ((0, B_pad - B), (0, 0)))

    (w1, b1), (w2, b2), (w3, b3), (w4, b4), (w5, b5) = params
    mm_dtype = jnp.bfloat16 if use_bf16 else jnp.float32

    # MXU-bound weights pre-cast on host (halves resident VMEM, no per-step
    # cast).  W1 stays f32: it feeds the f32 VPU-FMA path.
    w2c = w2.astype(mm_dtype)
    w3c = w3.astype(mm_dtype)
    w4c = w4.astype(mm_dtype)
    # Zero-pad the last layer's 4-wide output to 128 lanes (sliced off below).
    w5p = jnp.zeros((w5.shape[0], OUT_PAD), mm_dtype).at[:, :out_dim].set(
        w5.astype(mm_dtype))
    b5p = jnp.zeros((1, OUT_PAD), jnp.float32).at[:, :out_dim].set(
        b5.reshape(1, -1))

    flat_args = [
        x,
        w1, b1.reshape(1, -1),
        w2c, b2.reshape(1, -1),
        w3c, b3.reshape(1, -1),
        w4c, b4.reshape(1, -1),
        w5p, b5p,
    ]

    # x tiled over the batch; weights/biases get constant block indices so they
    # stay resident in VMEM across all grid steps (no re-DMA).
    in_specs = [pl.BlockSpec((tile_b, in_dim), lambda i: (i, 0))]
    for a in flat_args[1:]:
        in_specs.append(pl.BlockSpec(a.shape, lambda i: (0, 0)))

    grid_spec = pltpu.PrefetchScalarGridSpec(
        num_scalar_prefetch=0,
        grid=(B_pad // tile_b,),
        in_specs=in_specs,
        out_specs=pl.BlockSpec((tile_b, OUT_PAD), lambda i: (i, 0)),
    )

    out = pl.pallas_call(
        deepnn_kernel,
        out_shape=jax.ShapeDtypeStruct((B_pad, OUT_PAD), jnp.float32),
        grid_spec=grid_spec,
        compiler_params=pltpu.CompilerParams(
            dimension_semantics=("parallel",)),   # v7x shards batch over 2 TCs
    )(*flat_args)

    return out[:B, :out_dim]


# --------------------------- deterministic params ---------------------------

def init_params(key):
    """Mimic nn.Linear default init: U(-1/sqrt(fan_in), +1/sqrt(fan_in)).
    Weights stored as (in, out) so the kernel computes x @ W + b, numerically
    identical to PyTorch's x @ W_pt.T + b."""
    dims = [3, 64, 128, 64, 32, 4]
    params = []
    for fan_in, fan_out in zip(dims[:-1], dims[1:]):
        key, kw, kb = jax.random.split(key, 3)
        bound = 1.0 / jnp.sqrt(jnp.float32(fan_in))
        W = jax.random.uniform(kw, (fan_in, fan_out), jnp.float32, -bound, bound)
        b = jax.random.uniform(kb, (fan_out,), jnp.float32, -bound, bound)
        params.append((W, b))
    return params


# ------------------------------- references ---------------------------------

def deepnn_reference(x, params):
    """Pure-f32 PyTorch-semantics reference."""
    h = x
    for i, (W, b) in enumerate(params):
        h = h @ W + b
        if i < len(params) - 1:
            h = jnp.maximum(h, 0.0)
    return h


def deepnn_reference_matched(x, params, use_bf16=True):
    """Reference mirroring the kernel numerics exactly: f32 FMAs for layer 1,
    bf16 MXU operands + f32 accumulation for layers 2-5."""
    mm = jnp.bfloat16 if use_bf16 else jnp.float32
    (w1, b1) = params[0]
    h = (x[:, 0:1] * w1[0:1, :] + x[:, 1:2] * w1[1:2, :]
         + x[:, 2:3] * w1[2:3, :] + b1.reshape(1, -1))
    h = jnp.maximum(h, 0.0)
    for i, (W, b) in enumerate(params[1:]):
        h = jnp.dot(h.astype(mm), W.astype(mm),
                    preferred_element_type=jnp.float32) + b.reshape(1, -1)
        if i < len(params) - 2:
            h = jnp.maximum(h, 0.0)
    return h


if __name__ == "__main__":
    key = jax.random.PRNGKey(0)
    key, kx1, kx2 = jax.random.split(key, 3)
    params = init_params(key)

    # Small batch demo.
    x_small = jax.random.normal(kx1, (8, 3), jnp.float32)
    out_small = jax.block_until_ready(deepnn_forward(x_small, params))

    # Ragged, larger batch: exercises tile_b=512, host batch-padding, and a
    # multi-step parallel grid (2 steps -> both v7x TensorCores busy).
    x_big = jax.random.normal(kx2, (1000, 3), jnp.float32)
    out_big = jax.block_until_ready(deepnn_forward(x_big, params))

    for x, out in ((x_small, out_small), (x_big, out_big)):
        assert out.shape == (x.shape[0], 4), out.shape
        # Kernel-correctness check against the numerics-matched reference.
        ref_m = deepnn_reference_matched(x, params)
        assert jnp.allclose(out, ref_m, atol=1e-4, rtol=1e-4), "mismatch (matched ref)"
        # Semantics sanity vs the full-f32 reference (bf16 operand error ~1%).
        ref_f = deepnn_reference(x, params)
        assert jnp.allclose(out, ref_f, atol=1e-1, rtol=1e-1), "mismatch (f32 ref)"

    print("KERNEL_OK")
</pallas_src>

<mosaic_0001>
module attributes {stable_mosaic.version = 11 : i64} {
  func.func @deepnn_kernel(%arg0: i32, %arg1: memref<8x3xf32, #tpu.memory_space<vmem>>, %arg2: memref<3x64xf32, #tpu.memory_space<vmem>>, %arg3: memref<1x64xf32, #tpu.memory_space<vmem>>, %arg4: memref<64x128xbf16, #tpu.memory_space<vmem>>, %arg5: memref<1x128xf32, #tpu.memory_space<vmem>>, %arg6: memref<128x64xbf16, #tpu.memory_space<vmem>>, %arg7: memref<1x64xf32, #tpu.memory_space<vmem>>, %arg8: memref<64x32xbf16, #tpu.memory_space<vmem>>, %arg9: memref<1x32xf32, #tpu.memory_space<vmem>>, %arg10: memref<32x128xbf16, #tpu.memory_space<vmem>>, %arg11: memref<1x128xf32, #tpu.memory_space<vmem>>, %arg12: memref<8x128xf32, #tpu.memory_space<vmem>>) attributes {dimension_semantics = [#tpu.dimension_semantics<parallel>], iteration_bounds = array<i64: 1>, scalar_prefetch = 0 : i64, scratch_operands = 0 : i64, tpu.core_type = #tpu.core_type<tc>, window_params = [{transform_indices = @transform_0, window_bounds = array<i64: 8, 3>}, {pipeline_mode = #tpu.pipeline_mode<synchronous>, transform_indices = @transform_1, window_bounds = array<i64: 3, 64>}, {pipeline_mode = #tpu.pipeline_mode<synchronous>, transform_indices = @transform_2, window_bounds = array<i64: 1, 64>}, {pipeline_mode = #tpu.pipeline_mode<synchronous>, transform_indices = @transform_3, window_bounds = array<i64: 64, 128>}, {pipeline_mode = #tpu.pipeline_mode<synchronous>, transform_indices = @transform_4, window_bounds = array<i64: 1, 128>}, {pipeline_mode = #tpu.pipeline_mode<synchronous>, transform_indices = @transform_5, window_bounds = array<i64: 128, 64>}, {pipeline_mode = #tpu.pipeline_mode<synchronous>, transform_indices = @transform_6, window_bounds = array<i64: 1, 64>}, {pipeline_mode = #tpu.pipeline_mode<synchronous>, transform_indices = @transform_7, window_bounds = array<i64: 64, 32>}, {pipeline_mode = #tpu.pipeline_mode<synchronous>, transform_indices = @transform_8, window_bounds = array<i64: 1, 32>}, {pipeline_mode = #tpu.pipeline_mode<synchronous>, transform_indices = @transform_9, window_bounds = array<i64: 32, 128>}, {pipeline_mode = #tpu.pipeline_mode<synchronous>, transform_indices = @transform_10, window_bounds = array<i64: 1, 128>}, {transform_indices = @transform_11, window_bounds = array<i64: 8, 128>}]} {
    %c0 = arith.constant 0 : index
    %c0_0 = arith.constant 0 : index
    %0 = vector.load %arg1[%c0, %c0_0] : memref<8x3xf32, #tpu.memory_space<vmem>>, vector<8x3xf32>
    %1 = vector.extract_strided_slice %0 {offsets = [0, 0], sizes = [8, 1], strides = [1, 1]} : vector<8x3xf32> to vector<8x1xf32>
    %c0_1 = arith.constant 0 : index
    %c0_2 = arith.constant 0 : index
    %2 = vector.load %arg2[%c0_1, %c0_2] : memref<3x64xf32, #tpu.memory_space<vmem>>, vector<1x64xf32>
    %3 = vector.broadcast %1 : vector<8x1xf32> to vector<8x64xf32>
    %4 = vector.broadcast %2 : vector<1x64xf32> to vector<8x64xf32>
    %5 = arith.mulf %3, %4 : vector<8x64xf32>
    %6 = vector.extract_strided_slice %0 {offsets = [0, 1], sizes = [8, 1], strides = [1, 1]} : vector<8x3xf32> to vector<8x1xf32>
    %c1 = arith.constant 1 : index
    %c0_3 = arith.constant 0 : index
    %7 = vector.load %arg2[%c1, %c0_3] : memref<3x64xf32, #tpu.memory_space<vmem>>, vector<1x64xf32>
    %8 = vector.broadcast %6 : vector<8x1xf32> to vector<8x64xf32>
    %9 = vector.broadcast %7 : vector<1x64xf32> to vector<8x64xf32>
    %10 = arith.mulf %8, %9 : vector<8x64xf32>
    %11 = arith.addf %5, %10 : vector<8x64xf32>
    %12 = vector.extract_strided_slice %0 {offsets = [0, 2], sizes = [8, 1], strides = [1, 1]} : vector<8x3xf32> to vector<8x1xf32>
    %c2 = arith.constant 2 : index
    %c0_4 = arith.constant 0 : index
    %13 = vector.load %arg2[%c2, %c0_4] : memref<3x64xf32, #tpu.memory_space<vmem>>, vector<1x64xf32>
    %14 = vector.broadcast %12 : vector<8x1xf32> to vector<8x64xf32>
    %15 = vector.broadcast %13 : vector<1x64xf32> to vector<8x64xf32>
    %16 = arith.mulf %14, %15 : vector<8x64xf32>
    %17 = arith.addf %11, %16 : vector<8x64xf32>
    %c0_5 = arith.constant 0 : index
    %c0_6 = arith.constant 0 : index
    %18 = vector.load %arg3[%c0_5, %c0_6] : memref<1x64xf32, #tpu.memory_space<vmem>>, vector<1x64xf32>
    %19 = vector.broadcast %18 : vector<1x64xf32> to vector<8x64xf32>
    %20 = arith.addf %17, %19 : vector<8x64xf32>
    %cst = arith.constant 0.000000e+00 : f32
    %21 = vector.broadcast %cst : f32 to vector<8x64xf32>
    %22 = arith.maximumf %20, %21 : vector<8x64xf32>
    %23 = arith.truncf %22 : vector<8x64xf32> to vector<8x64xbf16>
    %c0_7 = arith.constant 0 : index
    %c0_8 = arith.constant 0 : index
    %24 = vector.load %arg4[%c0_7, %c0_8] : memref<64x128xbf16, #tpu.memory_space<vmem>>, vector<64x128xbf16>
    %cst_9 = arith.constant dense<0.000000e+00> : vector<8x128xf32>
    %25 = tpu.matmul %23, %24, %cst_9 {dimension_numbers = #tpu.dot_dimension_numbers<[1], [0], [0], [1], [0, 0, 1, 1], [], []>} : vector<8x64xbf16>, vector<64x128xbf16>, vector<8x128xf32> -> vector<8x128xf32>
    %c0_10 = arith.constant 0 : index
    %c0_11 = arith.constant 0 : index
    %26 = vector.load %arg5[%c0_10, %c0_11] : memref<1x128xf32, #tpu.memory_space<vmem>>, vector<1x128xf32>
    %27 = vector.broadcast %26 : vector<1x128xf32> to vector<8x128xf32>
    %28 = arith.addf %25, %27 : vector<8x128xf32>
    %cst_12 = arith.constant 0.000000e+00 : f32
    %29 = vector.broadcast %cst_12 : f32 to vector<8x128xf32>
    %30 = arith.maximumf %28, %29 : vector<8x128xf32>
    %31 = arith.truncf %30 : vector<8x128xf32> to vector<8x128xbf16>
    %c0_13 = arith.constant 0 : index
    %c0_14 = arith.constant 0 : index
    %32 = vector.load %arg6[%c0_13, %c0_14] : memref<128x64xbf16, #tpu.memory_space<vmem>>, vector<128x64xbf16>
    %cst_15 = arith.constant dense<0.000000e+00> : vector<8x64xf32>
    %33 = tpu.matmul %31, %32, %cst_15 {dimension_numbers = #tpu.dot_dimension_numbers<[1], [0], [0], [1], [0, 0, 1, 1], [], []>} : vector<8x128xbf16>, vector<128x64xbf16>, vector<8x64xf32> -> vector<8x64xf32>
    %c0_16 = arith.constant 0 : index
    %c0_17 = arith.constant 0 : index
    %34 = vector.load %arg7[%c0_16, %c0_17] : memref<1x64xf32, #tpu.memory_space<vmem>>, vector<1x64xf32>
    %35 = vector.broadcast %34 : vector<1x64xf32> to vector<8x64xf32>
    %36 = arith.addf %33, %35 : vector<8x64xf32>
    %cst_18 = arith.constant 0.000000e+00 : f32
    %37 = vector.broadcast %cst_18 : f32 to vector<8x64xf32>
    %38 = arith.maximumf %36, %37 : vector<8x64xf32>
    %39 = arith.truncf %38 : vector<8x64xf32> to vector<8x64xbf16>
    %c0_19 = arith.constant 0 : index
    %c0_20 = arith.constant 0 : index
    %40 = vector.load %arg8[%c0_19, %c0_20] : memref<64x32xbf16, #tpu.memory_space<vmem>>, vector<64x32xbf16>
    %cst_21 = arith.constant dense<0.000000e+00> : vector<8x32xf32>
    %41 = tpu.matmul %39, %40, %cst_21 {dimension_numbers = #tpu.dot_dimension_numbers<[1], [0], [0], [1], [0, 0, 1, 1], [], []>} : vector<8x64xbf16>, vector<64x32xbf16>, vector<8x32xf32> -> vector<8x32xf32>
    %c0_22 = arith.constant 0 : index
    %c0_23 = arith.constant 0 : index
    %42 = vector.load %arg9[%c0_22, %c0_23] : memref<1x32xf32, #tpu.memory_space<vmem>>, vector<1x32xf32>
    %43 = vector.broadcast %42 : vector<1x32xf32> to vector<8x32xf32>
    %44 = arith.addf %41, %43 : vector<8x32xf32>
    %cst_24 = arith.constant 0.000000e+00 : f32
    %45 = vector.broadcast %cst_24 : f32 to vector<8x32xf32>
    %46 = arith.maximumf %44, %45 : vector<8x32xf32>
    %47 = arith.truncf %46 : vector<8x32xf32> to vector<8x32xbf16>
    %c0_25 = arith.constant 0 : index
    %c0_26 = arith.constant 0 : index
    %48 = vector.load %arg10[%c0_25, %c0_26] : memref<32x128xbf16, #tpu.memory_space<vmem>>, vector<32x128xbf16>
    %cst_27 = arith.constant dense<0.000000e+00> : vector<8x128xf32>
    %49 = tpu.matmul %47, %48, %cst_27 {dimension_numbers = #tpu.dot_dimension_numbers<[1], [0], [0], [1], [0, 0, 1, 1], [], []>} : vector<8x32xbf16>, vector<32x128xbf16>, vector<8x128xf32> -> vector<8x128xf32>
    %c0_28 = arith.constant 0 : index
    %c0_29 = arith.constant 0 : index
    %50 = vector.load %arg11[%c0_28, %c0_29] : memref<1x128xf32, #tpu.memory_space<vmem>>, vector<1x128xf32>
    %51 = vector.broadcast %50 : vector<1x128xf32> to vector<8x128xf32>
    %52 = arith.addf %49, %51 : vector<8x128xf32>
    %c0_30 = arith.constant 0 : index
    %c0_31 = arith.constant 0 : index
    %53 = vector.load %arg12[%c0_30, %c0_31] : memref<8x128xf32, #tpu.memory_space<vmem>>, vector<8x128xf32>
    tpu.vector_store %arg12[%c0_30, %c0_31], %52 {strides = array<i32>} : memref<8x128xf32, #tpu.memory_space<vmem>>, vector<8x128xf32>,
    return
  }
  func.func @transform_0(%arg0: i32) -> (i32, i32) {
    %c0_i32 = arith.constant 0 : i32
    %c0_i32_0 = arith.constant 0 : i32
    return %arg0, %c0_i32 : i32, i32
  }
  func.func @transform_1(%arg0: i32) -> (i32, i32) {
    %c0_i32 = arith.constant 0 : i32
    %c0_i32_0 = arith.constant 0 : i32
    %c0_i32_1 = arith.constant 0 : i32
    return %c0_i32, %c0_i32_0 : i32, i32
  }
  func.func @transform_2(%arg0: i32) -> (i32, i32) {
    %c0_i32 = arith.constant 0 : i32
    %c0_i32_0 = arith.constant 0 : i32
    %c0_i32_1 = arith.constant 0 : i32
    return %c0_i32, %c0_i32_0 : i32, i32
  }
  func.func @transform_3(%arg0: i32) -> (i32, i32) {
    %c0_i32 = arith.constant 0 : i32
    %c0_i32_0 = arith.constant 0 : i32
    %c0_i32_1 = arith.constant 0 : i32
    return %c0_i32, %c0_i32_0 : i32, i32
  }
  func.func @transform_4(%arg0: i32) -> (i32, i32) {
    %c0_i32 = arith.constant 0 : i32
    %c0_i32_0 = arith.constant 0 : i32
    %c0_i32_1 = arith.constant 0 : i32
    return %c0_i32, %c0_i32_0 : i32, i32
  }
  func.func @transform_5(%arg0: i32) -> (i32, i32) {
    %c0_i32 = arith.constant 0 : i32
    %c0_i32_0 = arith.constant 0 : i32
    %c0_i32_1 = arith.constant 0 : i32
    return %c0_i32, %c0_i32_0 : i32, i32
  }
  func.func @transform_6(%arg0: i32) -> (i32, i32) {
    %c0_i32 = arith.constant 0 : i32
    %c0_i32_0 = arith.constant 0 : i32
    %c0_i32_1 = arith.constant 0 : i32
    return %c0_i32, %c0_i32_0 : i32, i32
  }
  func.func @transform_7(%arg0: i32) -> (i32, i32) {
    %c0_i32 = arith.constant 0 : i32
    %c0_i32_0 = arith.constant 0 : i32
    %c0_i32_1 = arith.constant 0 : i32
    return %c0_i32, %c0_i32_0 : i32, i32
  }
  func.func @transform_8(%arg0: i32) -> (i32, i32) {
    %c0_i32 = arith.constant 0 : i32
    %c0_i32_0 = arith.constant 0 : i32
    %c0_i32_1 = arith.constant 0 : i32
    return %c0_i32, %c0_i32_0 : i32, i32
  }
  func.func @transform_9(%arg0: i32) -> (i32, i32) {
    %c0_i32 = arith.constant 0 : i32
    %c0_i32_0 = arith.constant 0 : i32
    %c0_i32_1 = arith.constant 0 : i32
    return %c0_i32, %c0_i32_0 : i32, i32
  }
  func.func @transform_10(%arg0: i32) -> (i32, i32) {
    %c0_i32 = arith.constant 0 : i32
    %c0_i32_0 = arith.constant 0 : i32
    %c0_i32_1 = arith.constant 0 : i32
    return %c0_i32, %c0_i32_0 : i32, i32
  }
  func.func @transform_11(%arg0: i32) -> (i32, i32) {
    %c0_i32 = arith.constant 0 : i32
    %c0_i32_0 = arith.constant 0 : i32
    return %arg0, %c0_i32 : i32, i32
  }
}

</mosaic_0001>

<llo_original>
// kernel: tpu_custom_call.1
$region0: #{tpu_custom_call.1}
  #allocation0 [shape = 'u32[]', space=smem, size = 0x4, offset = 0x4, fixed_abs, tag = 'smem constant byte address 0x4 - core index']
  #allocation1 [shape = 'u32[144,128]{1,0:T(1,128)}', space=vmem, size = 0x12000, scoped, tag = 'internal scratch']
  %s0 = inlined_call_operand.vmem [shape: f32[8,3], index: 0, kind: input, shape index: {}]
  %s1 = inlined_call_operand.vmem [shape: f32[3,64], index: 1, kind: input, shape index: {}]
  %s2 = inlined_call_operand.vmem [shape: f32[1,64], index: 2, kind: input, shape index: {}]
  %s3 = inlined_call_operand.vmem [shape: bf16[64,128], index: 3, kind: input, shape index: {}]
  %s4 = inlined_call_operand.vmem [shape: f32[1,128], index: 4, kind: input, shape index: {}]
  %s5 = inlined_call_operand.vmem [shape: bf16[128,64], index: 5, kind: input, shape index: {}]
  %s6 = inlined_call_operand.vmem [shape: f32[1,64], index: 6, kind: input, shape index: {}]
  %s7 = inlined_call_operand.vmem [shape: bf16[64,32], index: 7, kind: input, shape index: {}]
  %s8 = inlined_call_operand.vmem [shape: f32[1,32], index: 8, kind: input, shape index: {}]
  %s9 = inlined_call_operand.vmem [shape: bf16[32,128], index: 9, kind: input, shape index: {}]
  %s10 = inlined_call_operand.vmem [shape: f32[1,128], index: 10, kind: input, shape index: {}]
  %s11 = inlined_call_operand.hbm [shape: f32[8,128], index: 11, kind: output, shape index: {}]
  %s12 = sld [smem:[#allocation0]]
  $region54: #{tpu_custom_call.1} parent=0
    _
  %s14 = ssub.s32 1, %s12
  %s15 = scalar_select 0, %s14, %s12
  $region1: #{tpu_custom_call.1} parent=0
    #allocation2 [shape = 'u8[4096]{0}', space=vmem, size = 0x1000, scoped, tag = 'output window, operand 0, single buffered']
    #allocation3 [shape = 's32[1]{0}', space=sflag, size = 0x4, scoped, tag = 'scoped memory for tpu_custom_call.1']
    %16 = vsyncpa [#allocation3], 0
    // Predicated region
    $region2: #{tpu_custom_call.1} parent=1 // pred_check
      _
    $region3: #{tpu_custom_call.1} parent=1 // pred_check_branch
      %18 = sbr.rel (0) target = $region5
    $region4: #{tpu_custom_call.1} parent=1 // pred_region
      _
    $region5: #{tpu_custom_call.1} parent=1 // pred_fallthru
      _
    // Predicated region
    $region6: #{tpu_custom_call.1} parent=1 // pred_check
      _
    $region7: #{tpu_custom_call.1} parent=1 // pred_check_branch
      %20 = sbr.rel (0) target = $region9
    $region8: #{tpu_custom_call.1} parent=1 // pred_region
      _
    $region9: #{tpu_custom_call.1} parent=1 // pred_fallthru
      _
    // Predicated region
    $region10: #{tpu_custom_call.1} parent=1 // pred_check
      _
    $region11: #{tpu_custom_call.1} parent=1 // pred_check_branch
      %22 = sbr.rel (0) target = $region13
    $region12: #{tpu_custom_call.1} parent=1 // pred_region
      _
    $region13: #{tpu_custom_call.1} parent=1 // pred_fallthru
      _
    // Predicated region
    $region14: #{tpu_custom_call.1} parent=1 // pred_check
      _
    $region15: #{tpu_custom_call.1} parent=1 // pred_check_branch
      %24 = sbr.rel (0) target = $region17
    $region16: #{tpu_custom_call.1} parent=1 // pred_region
      _
    $region17: #{tpu_custom_call.1} parent=1 // pred_fallthru
      _
    // Predicated region
    $region18: #{tpu_custom_call.1} parent=1 // pred_check
      _
    $region19: #{tpu_custom_call.1} parent=1 // pred_check_branch
      %26 = sbr.rel (0) target = $region21
    $region20: #{tpu_custom_call.1} parent=1 // pred_region
      _
    $region21: #{tpu_custom_call.1} parent=1 // pred_fallthru
      _
    // Predicated region
    $region22: #{tpu_custom_call.1} parent=1 // pred_check
      _
    $region23: #{tpu_custom_call.1} parent=1 // pred_check_branch
      %28 = sbr.rel (0) target = $region25
    $region24: #{tpu_custom_call.1} parent=1 // pred_region
      _
    $region25: #{tpu_custom_call.1} parent=1 // pred_fallthru
      _
    // Predicated region
    $region26: #{tpu_custom_call.1} parent=1 // pred_check
      _
    $region27: #{tpu_custom_call.1} parent=1 // pred_check_branch
      %30 = sbr.rel (0) target = $region29
    $region28: #{tpu_custom_call.1} parent=1 // pred_region
      _
    $region29: #{tpu_custom_call.1} parent=1 // pred_fallthru
      _
    // Predicated region
    $region30: #{tpu_custom_call.1} parent=1 // pred_check
      _
    $region31: #{tpu_custom_call.1} parent=1 // pred_check_branch
      %32 = sbr.rel (0) target = $region33
    $region32: #{tpu_custom_call.1} parent=1 // pred_region
      _
    $region33: #{tpu_custom_call.1} parent=1 // pred_fallthru
      _
    // Predicated region
    $region34: #{tpu_custom_call.1} parent=1 // pred_check
      _
    $region35: #{tpu_custom_call.1} parent=1 // pred_check_branch
      %34 = sbr.rel (0) target = $region37
    $region36: #{tpu_custom_call.1} parent=1 // pred_region
      _
    $region37: #{tpu_custom_call.1} parent=1 // pred_fallthru
      _
    // Predicated region
    $region38: #{tpu_custom_call.1} parent=1 // pred_check
      _
    $region39: #{tpu_custom_call.1} parent=1 // pred_check_branch
      %36 = sbr.rel (0) target = $region41
    $region40: #{tpu_custom_call.1} parent=1 // pred_region
      _
    $region41: #{tpu_custom_call.1} parent=1 // pred_fallthru
      _
    // Predicated region
    $region42: #{tpu_custom_call.1} parent=1 // pred_check
      _
    $region43: #{tpu_custom_call.1} parent=1 // pred_check_branch
      %38 = sbr.rel (0) target = $region45
    $region44: #{tpu_custom_call.1} parent=1 // pred_region
      _
    $region45: #{tpu_custom_call.1} parent=1 // pred_fallthru
      _
    %v40 = vld [vmem:[%s0] sm:$0xff]
    %v41 = vld [vmem:[%s1] sm:$0x1]
    %43 = vset.pattern.permute.xlu0 0
    %44 = vperm.xlu0 %43, %v40
    %v45 = vpop.permute.xlu0 %44
    %v47 = vlaneseq
    %v48 = vshrl.u32 %v47, 7
    %v49 = vsub.s32 0, %v48
    %v50 = vrot.slane %v41, %v49
    %v51 = vmul.f32 %v45, %v50
    %v52 = vld [vmem:[%s1 + $0x1] sm:$0x1]
    %53 = vset.pattern.permute.xlu0 1
    %54 = vperm.xlu0 %53, %v40
    %v55 = vpop.permute.xlu0 %54
    %v57 = vlaneseq
    %v58 = vshrl.u32 %v57, 7
    %v59 = vsub.s32 0, %v58
    %v60 = vrot.slane %v52, %v59
    %v61 = vmul.f32 %v55, %v60
    %v62 = vadd.f32 %v51, %v61
    %v63 = vld [vmem:[%s1 + $0x2] sm:$0x1]
    %64 = vset.pattern.permute.xlu0 2
    %65 = vperm.xlu0 %64, %v40
    %v66 = vpop.permute.xlu0 %65
    %v68 = vlaneseq
    %v69 = vshrl.u32 %v68, 7
    %v70 = vsub.s32 0, %v69
    %v71 = vrot.slane %v63, %v70
    %v72 = vmul.f32 %v66, %v71
    %v73 = vadd.f32 %v62, %v72
    %v74 = vld [vmem:[%s2] sm:$0x1]
    %v76 = vlaneseq
    %v77 = vshrl.u32 %v76, 7
    %v78 = vsub.s32 0, %v77
    %v79 = vrot.slane %v74, %v78
    %v81 = vadd.f32 %v73, %v79
    %v82 = vmax.f32 %v81, 0.0
    %v83 = vpack.c.bf16 %v82, %v82
    %v84 = vld [vmem:[%s3] sm:$0xf]
    %v85 = vld [vmem:[%s3 + $0x4] sm:$0xf]
    %v86 = vld [vmem:[%s3 + $0x8] sm:$0xf]
    %v87 = vld [vmem:[%s3 + $0xc] sm:$0xf]
    %v88 = vld [vmem:[%s3 + $0x10] sm:$0xf]
    %v89 = vld [vmem:[%s3 + $0x14] sm:$0xf]
    %v90 = vld [vmem:[%s3 + $0x18] sm:$0xf]
    %v91 = vld [vmem:[%s3 + $0x1c] sm:$0xf]
    %v92 = vld [vmem:[%s4] sm:$0x1]
    %v94 = vlaneseq
    %v95 = vshrl.u32 %v94, 7
    %v96 = vsub.s32 0, %v95
    %v97 = vrot.slane %v92, %v96
    %v107 = vunpack.c.l.b16 %v84
    %v108 = vunpack.c.l.b16 %v85
    %v109 = vunpack.c.l.b16 %v86
    %v110 = vunpack.c.l.b16 %v87
    %v111 = vunpack.c.l.b16 %v88
    %v112 = vunpack.c.l.b16 %v89
    %v113 = vunpack.c.l.b16 %v90
    %v114 = vunpack.c.l.b16 %v91
    %v115 = vpack.c.b16 %v108, %v107
    %v116 = vpack.c.b16 %v110, %v109
    %v117 = vpack.c.b16 %v112, %v111
    %v118 = vpack.c.b16 %v114, %v113
    %vm123 = vcmask 523264
    %v125 = vsel %vm123, %v83, 0
    %127 = vmatprep.subr.bf16.mxu0 0
    %128 = vmatpush1.bf16.msra.mxu0 0
    %129 = vmatprep.subr.bf16.mxu0 0
    %130 = vmatpush1.bf16.msra.mxu0 0
    %131 = vmatprep.subr.bf16.mxu0 0
    %132 = vmatpush1.bf16.msra.mxu0 0
    %133 = vmatprep.subr.bf16.mxu0 0
    %134 = vmatpush1.bf16.msra.mxu0 0
    %135 = vmatprep.subr.bf16.mxu0 0
    %136 = vmatpush1.bf16.msra.mxu0 %v118
    %137 = vmatprep.subr.bf16.mxu0 0
    %138 = vmatpush1.bf16.msra.mxu0 %v117
    %139 = vmatprep.subr.bf16.mxu0 0
    %140 = vmatpush1.bf16.msra.mxu0 %v116
    %141 = vmatprep.subr.bf16.mxu0 0
    %142 = vmatpush1.bf16.msra.mxu0 %v115
    %143 = vmatprep.subr.bf16.mxu0 0
    %144 = vmatpush2.bf16.msra.mxu0 0
    %145 = vmatprep.subr.bf16.mxu0 0
    %146 = vmatpush2.bf16.msra.mxu0 0
    %147 = vmatprep.subr.bf16.mxu0 0
    %148 = vmatpush2.bf16.msra.mxu0 0
    %149 = vmatprep.subr.bf16.mxu0 0
    %150 = vmatpush2.bf16.msra.mxu0 0
    %151 = vmatprep.subr.bf16.mxu0 0
    %152 = vmatpush2.bf16.msra.mxu0 0
    %153 = vmatprep.subr.bf16.mxu0 0
    %154 = vmatpush2.bf16.msra.mxu0 0
    %155 = vmatprep.subr.bf16.mxu0 0
    %156 = vmatpush2.bf16.msra.mxu0 0
    %157 = vmatprep.subr.bf16.mxu0 0
    %158 = vmatpush2.bf16.msra.mxu0 0
    %159 = vmatprep.mubr.bf16.mxu0 0
    %160 = vmatmul.mubr.bf16.gmra.mxu0 %v125
    %v161 = vpop.f32.mrf.mxu0
    %v162 = vadd.f32 %v97, %v161
    %v163 = vpop.f32.mrf.mxu0
    %v164 = vpop.f32.mrf.mxu0
    %v165 = vpop.f32.mrf.mxu0
    %166 = vdwg.mxu0
    %v167 = vmax.f32 %v162, 0.0
    %v168 = vpack.c.bf16 %v167, %v167
    %v169 = vld [vmem:[%s5] sm:$0xf]
    %v170 = vld [vmem:[%s5 + $0x4] sm:$0xf]
    %v171 = vld [vmem:[%s5 + $0x8] sm:$0xf]
    %v172 = vld [vmem:[%s5 + $0xc] sm:$0xf]
    %v173 = vld [vmem:[%s5 + $0x10] sm:$0xf]
    %v174 = vld [vmem:[%s5 + $0x14] sm:$0xf]
    %v175 = vld [vmem:[%s5 + $0x18] sm:$0xf]
    %v176 = vld [vmem:[%s5 + $0x1c] sm:$0xf]
    %v177 = vld [vmem:[%s5 + $0x20] sm:$0xf]
    %v178 = vld [vmem:[%s5 + $0x24] sm:$0xf]
    %v179 = vld [vmem:[%s5 + $0x28] sm:$0xf]
    %v180 = vld [vmem:[%s5 + $0x2c] sm:$0xf]
    %v181 = vld [vmem:[%s5 + $0x30] sm:$0xf]
    %v182 = vld [vmem:[%s5 + $0x34] sm:$0xf]
    %v183 = vld [vmem:[%s5 + $0x38] sm:$0xf]
    %v184 = vld [vmem:[%s5 + $0x3c] sm:$0xf]
    %v185 = vld [vmem:[%s6] sm:$0x1]
    %v187 = vlaneseq
    %v188 = vshrl.u32 %v187, 7
    %v189 = vsub.s32 0, %v188
    %v190 = vrot.slane %v185, %v189
    %v208 = vunpack.c.l.b16 %v169
    %v209 = vunpack.c.l.b16 %v170
    %v210 = vunpack.c.l.b16 %v171
    %v211 = vunpack.c.l.b16 %v172
    %v212 = vunpack.c.l.b16 %v173
    %v213 = vunpack.c.l.b16 %v174
    %v214 = vunpack.c.l.b16 %v175
    %v215 = vunpack.c.l.b16 %v176
    %v216 = vunpack.c.l.b16 %v177
    %v217 = vunpack.c.l.b16 %v178
    %v218 = vunpack.c.l.b16 %v179
    %v219 = vunpack.c.l.b16 %v180
    %v220 = vunpack.c.l.b16 %v181
    %v221 = vunpack.c.l.b16 %v182
    %v222 = vunpack.c.l.b16 %v183
    %v223 = vunpack.c.l.b16 %v184
    %v224 = vpack.c.b16 %v209, %v208
    %v225 = vpack.c.b16 %v211, %v210
    %v226 = vpack.c.b16 %v213, %v212
    %v227 = vpack.c.b16 %v215, %v214
    %v228 = vpack.c.b16 %v217, %v216
    %v229 = vpack.c.b16 %v219, %v218
    %v230 = vpack.c.b16 %v221, %v220
    %v231 = vpack.c.b16 %v223, %v222
    %240 = vmatprep.subr.bf16.mxu0 0
    %241 = vmatpush1.bf16.msra.mxu0 %v231
    %242 = vmatprep.subr.bf16.mxu0 0
    %243 = vmatpush1.bf16.msra.mxu0 %v230
    %244 = vmatprep.subr.bf16.mxu0 0
    %245 = vmatpush1.bf16.msra.mxu0 %v229
    %246 = vmatprep.subr.bf16.mxu0 0
    %247 = vmatpush1.bf16.msra.mxu0 %v228
    %248 = vmatprep.subr.bf16.mxu0 0
    %249 = vmatpush1.bf16.msra.mxu0 %v227
    %250 = vmatprep.subr.bf16.mxu0 0
    %251 = vmatpush1.bf16.msra.mxu0 %v226
    %252 = vmatprep.subr.bf16.mxu0 0
    %253 = vmatpush1.bf16.msra.mxu0 %v225
    %254 = vmatprep.subr.bf16.mxu0 0
    %255 = vmatpush1.bf16.msra.mxu0 %v224
    %256 = vmatprep.subr.bf16.mxu0 0
    %257 = vmatpush2.bf16.msra.mxu0 0
    %258 = vmatprep.subr.bf16.mxu0 0
    %259 = vmatpush2.bf16.msra.mxu0 0
    %260 = vmatprep.subr.bf16.mxu0 0
    %261 = vmatpush2.bf16.msra.mxu0 0
    %262 = vmatprep.subr.bf16.mxu0 0
    %263 = vmatpush2.bf16.msra.mxu0 0
    %264 = vmatprep.subr.bf16.mxu0 0
    %265 = vmatpush2.bf16.msra.mxu0 0
    %266 = vmatprep.subr.bf16.mxu0 0
    %267 = vmatpush2.bf16.msra.mxu0 0
    %268 = vmatprep.subr.bf16.mxu0 0
    %269 = vmatpush2.bf16.msra.mxu0 0
    %270 = vmatprep.subr.bf16.mxu0 0
    %271 = vmatpush2.bf16.msra.mxu0 0
    %272 = vmatprep.mubr.bf16.mxu0 0
    %273 = vmatmul.mubr.bf16.gmra.mxu0 %v168
    %v274 = vpop.f32.mrf.mxu0
    %v275 = vadd.f32 %v190, %v274
    %v276 = vpop.f32.mrf.mxu0
    %v277 = vpop.f32.mrf.mxu0
    %v278 = vpop.f32.mrf.mxu0
    %279 = vdwg.mxu0
    %v280 = vmax.f32 %v275, 0.0
    %v281 = vpack.c.bf16 %v280, %v280
    %v282 = vld [vmem:[%s7] sm:$0xf]
    %v283 = vld [vmem:[%s7 + $0x4] sm:$0xf]
    %v284 = vld [vmem:[%s7 + $0x8] sm:$0xf]
    %v285 = vld [vmem:[%s7 + $0xc] sm:$0xf]
    %v286 = vld [vmem:[%s7 + $0x10] sm:$0xf]
    %v287 = vld [vmem:[%s7 + $0x14] sm:$0xf]
    %v288 = vld [vmem:[%s7 + $0x18] sm:$0xf]
    %v289 = vld [vmem:[%s7 + $0x1c] sm:$0xf]
    %v290 = vld [vmem:[%s8] sm:$0x1]
    %v292 = vlaneseq
    %v293 = vshrl.u32 %v292, 7
    %v294 = vsub.s32 0, %v293
    %v295 = vrot.slane %v290, %v294
    %v305 = vunpack.c.l.b16 %v282
    %v306 = vunpack.c.l.b16 %v283
    %v307 = vunpack.c.l.b16 %v284
    %v308 = vunpack.c.l.b16 %v285
    %v309 = vunpack.c.l.b16 %v286
    %v310 = vunpack.c.l.b16 %v287
    %v311 = vunpack.c.l.b16 %v288
    %v312 = vunpack.c.l.b16 %v289
    %v313 = vpack.c.b16 %v306, %v305
    %v314 = vpack.c.b16 %v308, %v307
    %v315 = vpack.c.b16 %v310, %v309
    %v316 = vpack.c.b16 %v312, %v311
    %v322 = vsel %vm123, %v281, 0
    %324 = vmatprep.subr.bf16.mxu0 0
    %325 = vmatpush1.bf16.msra.mxu0 0
    %326 = vmatprep.subr.bf16.mxu0 0
    %327 = vmatpush1.bf16.msra.mxu0 0
    %328 = vmatprep.subr.bf16.mxu0 0
    %329 = vmatpush1.bf16.msra.mxu0 0
    %330 = vmatprep.subr.bf16.mxu0 0
    %331 = vmatpush1.bf16.msra.mxu0 0
    %332 = vmatprep.subr.bf16.mxu0 0
    %333 = vmatpush1.bf16.msra.mxu0 %v316
    %334 = vmatprep.subr.bf16.mxu0 0
    %335 = vmatpush1.bf16.msra.mxu0 %v315
    %336 = vmatprep.subr.bf16.mxu0 0
    %337 = vmatpush1.bf16.msra.mxu0 %v314
    %338 = vmatprep.subr.bf16.mxu0 0
    %339 = vmatpush1.bf16.msra.mxu0 %v313
    %340 = vmatprep.subr.bf16.mxu0 0
    %341 = vmatpush2.bf16.msra.mxu0 0
    %342 = vmatprep.subr.bf16.mxu0 0
    %343 = vmatpush2.bf16.msra.mxu0 0
    %344 = vmatprep.subr.bf16.mxu0 0
    %345 = vmatpush2.bf16.msra.mxu0 0
    %346 = vmatprep.subr.bf16.mxu0 0
    %347 = vmatpush2.bf16.msra.mxu0 0
    %348 = vmatprep.subr.bf16.mxu0 0
    %349 = vmatpush2.bf16.msra.mxu0 0
    %350 = vmatprep.subr.bf16.mxu0 0
    %351 = vmatpush2.bf16.msra.mxu0 0
    %352 = vmatprep.subr.bf16.mxu0 0
    %353 = vmatpush2.bf16.msra.mxu0 0
    %354 = vmatprep.subr.bf16.mxu0 0
    %355 = vmatpush2.bf16.msra.mxu0 0
    %356 = vmatprep.mubr.bf16.mxu0 0
    %357 = vmatmul.mubr.bf16.gmra.mxu0 %v322
    %v358 = vpop.f32.mrf.mxu0
    %v359 = vadd.f32 %v295, %v358
    %v360 = vpop.f32.mrf.mxu0
    %v361 = vpop.f32.mrf.mxu0
    %v362 = vpop.f32.mrf.mxu0
    %363 = vdwg.mxu0
    %v364 = vmax.f32 %v359, 0.0
    %v365 = vpack.c.bf16 %v364, %v364
    %v366 = vld [vmem:[%s9] sm:$0xf]
    %v367 = vld [vmem:[%s9 + $0x4] sm:$0xf]
    %v368 = vld [vmem:[%s9 + $0x8] sm:$0xf]
    %v369 = vld [vmem:[%s9 + $0xc] sm:$0xf]
    %v370 = vld [vmem:[%s10] sm:$0x1]
    %v372 = vlaneseq
    %v373 = vshrl.u32 %v372, 7
    %v374 = vsub.s32 0, %v373
    %v375 = vrot.slane %v370, %v374
    %v381 = vunpack.c.l.b16 %v366
    %v382 = vunpack.c.l.b16 %v367
    %v383 = vunpack.c.l.b16 %v368
    %v384 = vunpack.c.l.b16 %v369
    %v385 = vpack.c.b16 %v382, %v381
    %v386 = vpack.c.b16 %v384, %v383
    %vm389 = vcmask 261120
    %v391 = vsel %vm389, %v365, 0
    %393 = vmatprep.subr.bf16.mxu0 0
    %394 = vmatpush1.bf16.msra.mxu0 0
    %395 = vmatprep.subr.bf16.mxu0 0
    %396 = vmatpush1.bf16.msra.mxu0 0
    %397 = vmatprep.subr.bf16.mxu0 0
    %398 = vmatpush1.bf16.msra.mxu0 0
    %399 = vmatprep.subr.bf16.mxu0 0
    %400 = vmatpush1.bf16.msra.mxu0 0
    %401 = vmatprep.subr.bf16.mxu0 0
    %402 = vmatpush1.bf16.msra.mxu0 0
    %403 = vmatprep.subr.bf16.mxu0 0
    %404 = vmatpush1.bf16.msra.mxu0 0
    %405 = vmatprep.subr.bf16.mxu0 0
    %406 = vmatpush1.bf16.msra.mxu0 %v386
    %407 = vmatprep.subr.bf16.mxu0 0
    %408 = vmatpush1.bf16.msra.mxu0 %v385
    %409 = vmatprep.subr.bf16.mxu0 0
    %410 = vmatpush2.bf16.msra.mxu0 0
    %411 = vmatprep.subr.bf16.mxu0 0
    %412 = vmatpush2.bf16.msra.mxu0 0
    %413 = vmatprep.subr.bf16.mxu0 0
    %414 = vmatpush2.bf16.msra.mxu0 0
    %415 = vmatprep.subr.bf16.mxu0 0
    %416 = vmatpush2.bf16.msra.mxu0 0
    %417 = vmatprep.subr.bf16.mxu0 0
    %418 = vmatpush2.bf16.msra.mxu0 0
    %419 = vmatprep.subr.bf16.mxu0 0
    %420 = vmatpush2.bf16.msra.mxu0 0
    %421 = vmatprep.subr.bf16.mxu0 0
    %422 = vmatpush2.bf16.msra.mxu0 0
    %423 = vmatprep.subr.bf16.mxu0 0
    %424 = vmatpush2.bf16.msra.mxu0 0
    %425 = vmatprep.mubr.bf16.mxu0 0
    %426 = vmatmul.mubr.bf16.gmra.mxu0 %v391
    %v427 = vpop.f32.mrf.mxu0
    %v428 = vadd.f32 %v375, %v427
    %v429 = vpop.f32.mrf.mxu0
    %v430 = vpop.f32.mrf.mxu0
    %v431 = vpop.f32.mrf.mxu0
    %432 = vdwg.mxu0
    %433 = vst [vmem:[#allocation2] sm:$0xff] %v428
    // Predicated region
    $region46: #{tpu_custom_call.1} parent=1 // pred_check
      _
    $region47: #{tpu_custom_call.1} parent=1 // pred_check_branch
      %435 = sbr.rel (0) target = $region49
    $region48: #{tpu_custom_call.1} parent=1 // pred_region
      %s437 = ssub.s32 128, 128
      %438 = vsyncadd [#allocation3], %s437
      %s440 = sshll.u32 [#allocation2], 4
      %s441 = int_to_ptr.vmem [resolvable:$true] %s440
      %443 = dma.vmem_to_hbm [thread:$0]  %s441, 128, %s11, [#allocation3]
    $region49: #{tpu_custom_call.1} parent=1 // pred_fallthru
      _
    // Predicated region
    $region50: #{tpu_custom_call.1} parent=1 // pred_check
      _
    $region51: #{tpu_custom_call.1} parent=1 // pred_check_branch
      %445 = sbr.rel (0) target = $region53
    $region52: #{tpu_custom_call.1} parent=1 // pred_region
      %446 = dma.done [#allocation3], 128
    $region53: #{tpu_custom_call.1} parent=1 // pred_fallthru
      _
    %447 = vsyncpa [#allocation3], 1

</llo_original>
